<compile_context>
chip_gen: v7x
topology: tpu7x:2x2x1
jax: 0.10.0
libtpu: 0.0.40
codegen_flags: <defaults>
</compile_context>

<pallas_src>
import functools

import jax
import jax.numpy as jnp
from jax import lax
from jax.experimental import pallas as pl
from jax.experimental.pallas import tpu as pltpu


def _round_up(x, m):
    return (x + m - 1) // m * m


def _nc2_tiled_kernel(bi_ref, bj_ref, rows_ref, cols_ref, gmean_ref,
                      loss_ref, maxcos_ref, acc_ref, *, C, TC, padded):
    """Processes one upper-triangular (TC, TC) block of the cosine matrix."""
    t = pl.program_id(0)

    @pl.when(t == 0)
    def _init():
        acc_ref[0] = jnp.float32(0.0)    # sum(cosine^2)  (off-diag blocks doubled)
        acc_ref[1] = jnp.float32(0.0)    # sum(diag(cosine)^2)
        acc_ref[2] = jnp.float32(-2.0)   # running max of cosine_ (entries are >= -1)

    bi = bi_ref[t]
    bj = bj_ref[t]

    g = gmean_ref[...]                                            # (1, Dp)

    # --- center + fused rsqrt-normalize (F.normalize, p=2, eps=1e-12) ---
    r = rows_ref[...] - g                                          # (TC, Dp)
    rn = r * lax.rsqrt(jnp.maximum(jnp.sum(r * r, axis=1, keepdims=True), 1e-24))
    c = cols_ref[...] - g
    cn = c * lax.rsqrt(jnp.maximum(jnp.sum(c * c, axis=1, keepdims=True), 1e-24))

    li = lax.broadcasted_iota(jnp.int32, (TC, TC), 0)
    lj = lax.broadcasted_iota(jnp.int32, (TC, TC), 1)
    gi = bi * TC + li                                              # global row ids
    gj = bj * TC + lj                                              # global col ids
    diag_mask = gi == gj

    if padded:
        # Zero padded rows (global id >= C) so they contribute 0 to every sum.
        rv = (bi * TC + lax.broadcasted_iota(jnp.int32, (TC, 1), 0)) < C
        cv = (bj * TC + lax.broadcasted_iota(jnp.int32, (TC, 1), 0)) < C
        rn = jnp.where(rv, rn, 0.0)
        cn = jnp.where(cv, cn, 0.0)

    # --- one block of the cosine matrix on the MXU (f32 accumulate) ---
    cos = lax.dot_general(rn, cn, (((1,), (1,)), ((), ())),
                          preferred_element_type=jnp.float32)      # (TC, TC)

    cos_sq = cos * cos
    blk_sumsq = jnp.sum(cos_sq)
    blk_diag_sq = jnp.sum(jnp.where(diag_mask, cos_sq, 0.0))

    # max of cosine_ == cosine with its diagonal negated; mask padded pairs.
    cos_for_max = jnp.where(diag_mask, -cos, cos)
    if padded:
        cos_for_max = jnp.where(jnp.logical_and(gi < C, gj < C), cos_for_max, -2.0)
    blk_max = jnp.max(cos_for_max)

    weight = jnp.where(bi == bj, 1.0, 2.0)   # mirrored block is never visited
    acc_ref[0] = acc_ref[0] + weight * blk_sumsq
    acc_ref[1] = acc_ref[1] + blk_diag_sq
    acc_ref[2] = jnp.maximum(acc_ref[2], blk_max)

    @pl.when(t == pl.num_programs(0) - 1)
    def _finalize():
        # loss^2 = sum(cos^2) - (1 - 1/(C-1)^2) * sum(diag(cos)^2)
        # (C == 1 is undefined, exactly like the PyTorch reference.)
        corr = 1.0 - 1.0 / float((C - 1) * (C - 1))
        loss_sq = acc_ref[0] - jnp.float32(corr) * acc_ref[1]
        loss_ref[0, 0] = jnp.sqrt(jnp.maximum(loss_sq, 0.0))
        maxcos_ref[0, 0] = jnp.clip(acc_ref[2], -0.99999, 0.99999)


def nc2_loss_v2(means, *, block_c=256):
    """Pallas TPU implementation of NC2Loss_v2.forward(means) -> (loss, max_cosine)."""
    means = jnp.asarray(means, jnp.float32)
    C, D = means.shape

    # Global class-mean: cheap wrapper reduce so the kernel can stream row blocks.
    g_mean = jnp.sum(means, axis=0, keepdims=True) / C

    # Lane-dense (D -> 128 multiple) and sublane-aligned (C -> tile multiple) padding.
    Dp = _round_up(D, 128)
    TC = min(block_c, _round_up(C, 8))
    Cp = _round_up(C, TC)
    means_p = jnp.pad(means, ((0, Cp - C), (0, Dp - D)))
    g_mean_p = jnp.pad(g_mean, ((0, 0), (0, Dp - D)))

    # Upper-triangular block schedule, scalar-prefetched into SMEM.
    nb = Cp // TC
    pairs = [(i, j) for i in range(nb) for j in range(i, nb)]
    bi = jnp.asarray([p[0] for p in pairs], dtype=jnp.int32)
    bj = jnp.asarray([p[1] for p in pairs], dtype=jnp.int32)
    n_steps = len(pairs)

    kernel = functools.partial(_nc2_tiled_kernel, C=C, TC=TC, padded=(Cp != C))

    grid_spec = pltpu.PrefetchScalarGridSpec(
        num_scalar_prefetch=2,
        grid=(n_steps,),
        in_specs=[
            pl.BlockSpec((TC, Dp), lambda t, bi_r, bj_r: (bi_r[t], 0)),  # row block
            pl.BlockSpec((TC, Dp), lambda t, bi_r, bj_r: (bj_r[t], 0)),  # col block
            pl.BlockSpec((1, Dp), lambda t, bi_r, bj_r: (0, 0)),         # g_mean
        ],
        out_specs=(
            pl.BlockSpec((1, 1), lambda t, bi_r, bj_r: (0, 0),
                         memory_space=pltpu.MemorySpace.SMEM),
            pl.BlockSpec((1, 1), lambda t, bi_r, bj_r: (0, 0),
                         memory_space=pltpu.MemorySpace.SMEM),
        ),
        scratch_shapes=[pltpu.SMEM((3,), jnp.float32)],
    )

    # TODO(synk): for v7x megacore, split the block schedule over a leading
    # "parallel" grid axis with per-core partial sums combined afterwards.
    loss, max_cos = pl.pallas_call(
        kernel,
        grid_spec=grid_spec,
        out_shape=(jax.ShapeDtypeStruct((1, 1), jnp.float32),
                   jax.ShapeDtypeStruct((1, 1), jnp.float32)),
        compiler_params=pltpu.CompilerParams(dimension_semantics=("arbitrary",)),
        cost_estimate=pl.CostEstimate(
            flops=int(2 * n_steps * TC * TC * Dp),
            transcendentals=int(2 * n_steps * TC),
            bytes_accessed=int(4 * (2 * n_steps * TC * Dp + Dp + 2)),
        ),
    )(bi, bj, means_p, means_p, g_mean_p)
    return loss[0, 0], max_cos[0, 0]


def _nc2_ref(means):
    """Pure-JAX reference mirroring the PyTorch forward, for sanity checking."""
    means = means.astype(jnp.float32)
    C = means.shape[0]
    centered = means - jnp.mean(means, axis=0, keepdims=True)
    norm = jnp.maximum(jnp.linalg.norm(centered, axis=1, keepdims=True), 1e-12)
    normed = centered / norm
    cosine = normed @ normed.T
    d = jnp.diag(jnp.diag(cosine))
    cosine_ = cosine - 2.0 * d
    max_cosine = jnp.clip(jnp.max(cosine_), -0.99999, 0.99999)
    final = cosine_ + (1.0 - 1.0 / (C - 1)) * d
    loss = jnp.linalg.norm(final)
    return loss, max_cosine


if __name__ == "__main__":
    key = jax.random.PRNGKey(0)

    # Case 1: small "class means": C=8 classes, D=32 feature dim (single block).
    means = jax.random.normal(key, (8, 32), dtype=jnp.float32)
    loss, max_cos = nc2_loss_v2(means)
    jax.block_until_ready((loss, max_cos))
    ref_loss, ref_max = _nc2_ref(means)
    assert jnp.allclose(loss, ref_loss, atol=1e-4, rtol=1e-4)
    assert jnp.allclose(max_cos, ref_max, atol=1e-4, rtol=1e-4)

    # Case 2: exercises multi-block triangular grid + C/D padding + masking.
    key2 = jax.random.PRNGKey(0)
    means2 = jax.random.normal(key2, (20, 48), dtype=jnp.float32)
    loss2, max_cos2 = nc2_loss_v2(means2, block_c=8)
    jax.block_until_ready((loss2, max_cos2))
    ref_loss2, ref_max2 = _nc2_ref(means2)
    assert jnp.allclose(loss2, ref_loss2, atol=1e-4, rtol=1e-4)
    assert jnp.allclose(max_cos2, ref_max2, atol=1e-4, rtol=1e-4)

    print("KERNEL_OK")
</pallas_src>

<mosaic_0001>
module attributes {stable_mosaic.version = 11 : i64} {
  func.func @_nc2_tiled_kernel(%arg0: i32, %arg1: memref<1xi32, #tpu.memory_space<smem>>, %arg2: memref<1xi32, #tpu.memory_space<smem>>, %arg3: memref<8x128xf32, #tpu.memory_space<vmem>>, %arg4: memref<8x128xf32, #tpu.memory_space<vmem>>, %arg5: memref<1x128xf32, #tpu.memory_space<vmem>>, %arg6: memref<1x1xf32, #tpu.memory_space<smem>>, %arg7: memref<1x1xf32, #tpu.memory_space<smem>>, %arg8: memref<3xf32, #tpu.memory_space<smem>>) attributes {dimension_semantics = [#tpu.dimension_semantics<arbitrary>], iteration_bounds = array<i64: 1>, scalar_prefetch = 2 : i64, scratch_operands = 1 : i64, tpu.core_type = #tpu.core_type<tc>, window_params = [{transform_indices = @transform_0, window_bounds = array<i64: 8, 128>}, {transform_indices = @transform_1, window_bounds = array<i64: 8, 128>}, {pipeline_mode = #tpu.pipeline_mode<synchronous>, transform_indices = @transform_2, window_bounds = array<i64: 1, 128>}, {transform_indices = @transform_3, window_bounds = array<i64: 1, 1>}, {transform_indices = @transform_4, window_bounds = array<i64: 1, 1>}]} {
    %c0_i32 = arith.constant 0 : i32
    %0 = arith.cmpi eq, %arg0, %c0_i32 : i32
    %1 = arith.extui %0 : i1 to i32
    %c0_i32_0 = arith.constant 0 : i32
    %2 = arith.cmpi ne, %1, %c0_i32_0 : i32
    scf.if %2 {
      %cst_24 = arith.constant 0.000000e+00 : f32
      %c0_25 = arith.constant 0 : index
      %73 = memref.load %arg8[%c0_25] : memref<3xf32, #tpu.memory_space<smem>>
      memref.store %cst_24, %arg8[%c0_25] : memref<3xf32, #tpu.memory_space<smem>>
      %cst_26 = arith.constant 0.000000e+00 : f32
      %c1_27 = arith.constant 1 : index
      %74 = memref.load %arg8[%c1_27] : memref<3xf32, #tpu.memory_space<smem>>
      memref.store %cst_26, %arg8[%c1_27] : memref<3xf32, #tpu.memory_space<smem>>
      %cst_28 = arith.constant -2.000000e+00 : f32
      %c2_29 = arith.constant 2 : index
      %75 = memref.load %arg8[%c2_29] : memref<3xf32, #tpu.memory_space<smem>>
      memref.store %cst_28, %arg8[%c2_29] : memref<3xf32, #tpu.memory_space<smem>>
    } else {
    }
    %3 = arith.index_cast %arg0 : i32 to index
    %4 = memref.load %arg1[%3] : memref<1xi32, #tpu.memory_space<smem>>
    %5 = arith.index_cast %arg0 : i32 to index
    %6 = memref.load %arg2[%5] : memref<1xi32, #tpu.memory_space<smem>>
    %c0 = arith.constant 0 : index
    %c0_1 = arith.constant 0 : index
    %7 = vector.load %arg5[%c0, %c0_1] : memref<1x128xf32, #tpu.memory_space<vmem>>, vector<1x128xf32>
    %c0_2 = arith.constant 0 : index
    %c0_3 = arith.constant 0 : index
    %8 = vector.load %arg3[%c0_2, %c0_3] : memref<8x128xf32, #tpu.memory_space<vmem>>, vector<8x128xf32>
    %9 = vector.broadcast %7 : vector<1x128xf32> to vector<8x128xf32>
    %10 = arith.subf %8, %9 : vector<8x128xf32>
    %11 = arith.mulf %10, %10 : vector<8x128xf32>
    %cst = arith.constant dense<0.000000e+00> : vector<8xf32>
    %12 = vector.multi_reduction <add>, %11, %cst [1] : vector<8x128xf32> to vector<8xf32>
    %13 = vector.shape_cast %12 : vector<8xf32> to vector<8x1xf32>
    %cst_4 = arith.constant 1.000000e-24 : f32
    %14 = vector.broadcast %cst_4 : f32 to vector<8x1xf32>
    %15 = arith.maximumf %13, %14 : vector<8x1xf32>
    %16 = math.rsqrt %15 : vector<8x1xf32>
    %17 = vector.broadcast %16 : vector<8x1xf32> to vector<8x128xf32>
    %18 = arith.mulf %10, %17 : vector<8x128xf32>
    %c0_5 = arith.constant 0 : index
    %c0_6 = arith.constant 0 : index
    %19 = vector.load %arg4[%c0_5, %c0_6] : memref<8x128xf32, #tpu.memory_space<vmem>>, vector<8x128xf32>
    %20 = vector.broadcast %7 : vector<1x128xf32> to vector<8x128xf32>
    %21 = arith.subf %19, %20 : vector<8x128xf32>
    %22 = arith.mulf %21, %21 : vector<8x128xf32>
    %cst_7 = arith.constant dense<0.000000e+00> : vector<8xf32>
    %23 = vector.multi_reduction <add>, %22, %cst_7 [1] : vector<8x128xf32> to vector<8xf32>
    %24 = vector.shape_cast %23 : vector<8xf32> to vector<8x1xf32>
    %cst_8 = arith.constant 1.000000e-24 : f32
    %25 = vector.broadcast %cst_8 : f32 to vector<8x1xf32>
    %26 = arith.maximumf %24, %25 : vector<8x1xf32>
    %27 = math.rsqrt %26 : vector<8x1xf32>
    %28 = vector.broadcast %27 : vector<8x1xf32> to vector<8x128xf32>
    %29 = arith.mulf %21, %28 : vector<8x128xf32>
    %30 = tpu.iota {dimensions = array<i32: 0>} : vector<8x8xi32>
    %31 = tpu.iota {dimensions = array<i32: 1>} : vector<8x8xi32>
    %c8_i32 = arith.constant 8 : i32
    %32 = arith.muli %4, %c8_i32 : i32
    %33 = vector.broadcast %32 : i32 to vector<8x8xi32>
    %34 = arith.addi %33, %30 : vector<8x8xi32>
    %c8_i32_9 = arith.constant 8 : i32
    %35 = arith.muli %6, %c8_i32_9 : i32
    %36 = vector.broadcast %35 : i32 to vector<8x8xi32>
    %37 = arith.addi %36, %31 : vector<8x8xi32>
    %38 = arith.cmpi eq, %34, %37 : vector<8x8xi32>
    %cst_10 = arith.constant dense<0.000000e+00> : vector<8x8xf32>
    %39 = tpu.matmul %18, %29, %cst_10 {dimension_numbers = #tpu.dot_dimension_numbers<[1], [1], [0], [0], [0, 0, 1, 0], [], []>} : vector<8x128xf32>, vector<8x128xf32>, vector<8x8xf32> -> vector<8x8xf32>
    %40 = arith.mulf %39, %39 : vector<8x8xf32>
    %41 = vector.shape_cast %40 : vector<8x8xf32> to vector<1x8x8xf32>
    %cst_11 = arith.constant dense<0.000000e+00> : vector<1xf32>
    %42 = vector.multi_reduction <add>, %41, %cst_11 [1, 2] : vector<1x8x8xf32> to vector<1xf32>
    %43 = vector.shape_cast %42 : vector<1xf32> to vector<1x1x1xf32>
    %44 = vector.extract %43[0, 0, 0] : f32 from vector<1x1x1xf32>
    %cst_12 = arith.constant 0.000000e+00 : f32
    %45 = vector.broadcast %cst_12 : f32 to vector<8x8xf32>
    %46 = arith.select %38, %40, %45 : vector<8x8xi1>, vector<8x8xf32>
    %47 = vector.shape_cast %46 : vector<8x8xf32> to vector<1x8x8xf32>
    %cst_13 = arith.constant dense<0.000000e+00> : vector<1xf32>
    %48 = vector.multi_reduction <add>, %47, %cst_13 [1, 2] : vector<1x8x8xf32> to vector<1xf32>
    %49 = vector.shape_cast %48 : vector<1xf32> to vector<1x1x1xf32>
    %50 = vector.extract %49[0, 0, 0] : f32 from vector<1x1x1xf32>
    %cst_14 = arith.constant 0.000000e+00 : f32
    %51 = vector.broadcast %cst_14 : f32 to vector<8x8xf32>
    %52 = arith.subf %51, %39 : vector<8x8xf32>
    %53 = arith.select %38, %52, %39 : vector<8x8xi1>, vector<8x8xf32>
    %54 = vector.shape_cast %53 : vector<8x8xf32> to vector<1x8x8xf32>
    %cst_15 = arith.constant dense<0xFF800000> : vector<1xf32>
    %55 = vector.multi_reduction <maximumf>, %54, %cst_15 [1, 2] : vector<1x8x8xf32> to vector<1xf32>
    %56 = vector.shape_cast %55 : vector<1xf32> to vector<1x1x1xf32>
    %57 = vector.extract %56[0, 0, 0] : f32 from vector<1x1x1xf32>
    %58 = arith.cmpi eq, %4, %6 : i32
    %cst_16 = arith.constant 1.000000e+00 : f32
    %cst_17 = arith.constant 2.000000e+00 : f32
    %59 = arith.select %58, %cst_16, %cst_17 : f32
    %c0_18 = arith.constant 0 : index
    %60 = memref.load %arg8[%c0_18] : memref<3xf32, #tpu.memory_space<smem>>
    %61 = arith.mulf %59, %44 : f32
    %62 = arith.addf %60, %61 : f32
    %c0_19 = arith.constant 0 : index
    %63 = memref.load %arg8[%c0_19] : memref<3xf32, #tpu.memory_space<smem>>
    memref.store %62, %arg8[%c0_19] : memref<3xf32, #tpu.memory_space<smem>>
    %c1 = arith.constant 1 : index
    %64 = memref.load %arg8[%c1] : memref<3xf32, #tpu.memory_space<smem>>
    %65 = arith.addf %64, %50 : f32
    %c1_20 = arith.constant 1 : index
    %66 = memref.load %arg8[%c1_20] : memref<3xf32, #tpu.memory_space<smem>>
    memref.store %65, %arg8[%c1_20] : memref<3xf32, #tpu.memory_space<smem>>
    %c2 = arith.constant 2 : index
    %67 = memref.load %arg8[%c2] : memref<3xf32, #tpu.memory_space<smem>>
    %68 = arith.maximumf %67, %57 : f32
    %c2_21 = arith.constant 2 : index
    %69 = memref.load %arg8[%c2_21] : memref<3xf32, #tpu.memory_space<smem>>
    memref.store %68, %arg8[%c2_21] : memref<3xf32, #tpu.memory_space<smem>>
    %c0_i32_22 = arith.constant 0 : i32
    %70 = arith.cmpi eq, %arg0, %c0_i32_22 : i32
    %71 = arith.extui %70 : i1 to i32
    %c0_i32_23 = arith.constant 0 : i32
    %72 = arith.cmpi ne, %71, %c0_i32_23 : i32
    scf.if %72 {
      %c0_24 = arith.constant 0 : index
      %73 = memref.load %arg8[%c0_24] : memref<3xf32, #tpu.memory_space<smem>>
      %c1_25 = arith.constant 1 : index
      %74 = memref.load %arg8[%c1_25] : memref<3xf32, #tpu.memory_space<smem>>
      %cst_26 = arith.constant 0.979591846 : f32
      %75 = arith.mulf %cst_26, %74 : f32
      %76 = arith.subf %73, %75 : f32
      %cst_27 = arith.constant 0.000000e+00 : f32
      %77 = arith.maximumf %76, %cst_27 : f32
      %78 = math.sqrt %77 : f32
      %c0_28 = arith.constant 0 : index
      %c0_29 = arith.constant 0 : index
      %79 = memref.load %arg6[%c0_28, %c0_29] : memref<1x1xf32, #tpu.memory_space<smem>>
      memref.store %78, %arg6[%c0_28, %c0_29] : memref<1x1xf32, #tpu.memory_space<smem>>
      %c2_30 = arith.constant 2 : index
      %80 = memref.load %arg8[%c2_30] : memref<3xf32, #tpu.memory_space<smem>>
      %cst_31 = arith.constant -0.999989986 : f32
      %cst_32 = arith.constant 0.999989986 : f32
      %81 = arith.maximumf %cst_31, %80 : f32
      %82 = arith.minimumf %cst_32, %81 : f32
      %c0_33 = arith.constant 0 : index
      %c0_34 = arith.constant 0 : index
      %83 = memref.load %arg7[%c0_33, %c0_34] : memref<1x1xf32, #tpu.memory_space<smem>>
      memref.store %82, %arg7[%c0_33, %c0_34] : memref<1x1xf32, #tpu.memory_space<smem>>
    } else {
    }
    return
  }
  func.func @transform_0(%arg0: i32, %arg1: memref<1xi32, #tpu.memory_space<smem>>, %arg2: memref<1xi32, #tpu.memory_space<smem>>) -> (i32, i32) {
    %0 = arith.index_cast %arg0 : i32 to index
    %1 = memref.load %arg1[%0] : memref<1xi32, #tpu.memory_space<smem>>
    %c0_i32 = arith.constant 0 : i32
    %c0_i32_0 = arith.constant 0 : i32
    return %1, %c0_i32 : i32, i32
  }
  func.func @transform_1(%arg0: i32, %arg1: memref<1xi32, #tpu.memory_space<smem>>, %arg2: memref<1xi32, #tpu.memory_space<smem>>) -> (i32, i32) {
    %0 = arith.index_cast %arg0 : i32 to index
    %1 = memref.load %arg2[%0] : memref<1xi32, #tpu.memory_space<smem>>
    %c0_i32 = arith.constant 0 : i32
    %c0_i32_0 = arith.constant 0 : i32
    return %1, %c0_i32 : i32, i32
  }
  func.func @transform_2(%arg0: i32, %arg1: memref<1xi32, #tpu.memory_space<smem>>, %arg2: memref<1xi32, #tpu.memory_space<smem>>) -> (i32, i32) {
    %c0_i32 = arith.constant 0 : i32
    %c0_i32_0 = arith.constant 0 : i32
    %c0_i32_1 = arith.constant 0 : i32
    return %c0_i32, %c0_i32_0 : i32, i32
  }
  func.func @transform_3(%arg0: i32, %arg1: memref<1xi32, #tpu.memory_space<smem>>, %arg2: memref<1xi32, #tpu.memory_space<smem>>) -> (i32, i32) {
    %c0_i32 = arith.constant 0 : i32
    %c0_i32_0 = arith.constant 0 : i32
    %c0_i32_1 = arith.constant 0 : i32
    return %c0_i32, %c0_i32_0 : i32, i32
  }
  func.func @transform_4(%arg0: i32, %arg1: memref<1xi32, #tpu.memory_space<smem>>, %arg2: memref<1xi32, #tpu.memory_space<smem>>) -> (i32, i32) {
    %c0_i32 = arith.constant 0 : i32
    %c0_i32_0 = arith.constant 0 : i32
    %c0_i32_1 = arith.constant 0 : i32
    return %c0_i32, %c0_i32_0 : i32, i32
  }
}

</mosaic_0001>

<llo_original>
// kernel: tpu_custom_call.1
$region0: #{tpu_custom_call.1}
  #allocation0 [shape = 'u32[]', space=smem, size = 0x4, offset = 0x4, fixed_abs, tag = 'smem constant byte address 0x4 - core index']
  #allocation1 [shape = 'u32[144,128]{1,0:T(1,128)}', space=vmem, size = 0x12000, scoped, tag = 'internal scratch']
  #allocation2 [shape = 'f32[3]{0:T(128)}', space=smem, size = 0x200, scoped, tag = 'scratch operand']
  #allocation3 [shape = 's32[1]{0}', space=sflag, size = 0x4, scoped, tag = 'scoped memory for tpu_custom_call.1']
  #allocation4 [shape = 's32[1]{0:T(128)S(6)}', space=smem, size = 0x200, scoped, tag = 'prefetched SMEM operand 0']
  #allocation5 [shape = 's32[1]{0:T(128)S(6)}', space=smem, size = 0x200, scoped, tag = 'prefetched SMEM operand 1']
  %s0 = inlined_call_operand.<no memory space> [shape: s32[1], index: 0, kind: input, shape index: {}]
  %s1 = inlined_call_operand.<no memory space> [shape: s32[1], index: 1, kind: input, shape index: {}]
  %s2 = inlined_call_operand.hbm [shape: f32[8,128], index: 2, kind: input, shape index: {}]
  %s3 = inlined_call_operand.vmem [shape: f32[8,128], index: 3, kind: input, shape index: {}]
  %s4 = inlined_call_operand.vmem [shape: f32[1,128], index: 4, kind: input, shape index: {}]
  %s5 = inlined_call_operand.hbm [shape: f32[1,1], index: 5, kind: output, shape index: {0}]
  %s6 = inlined_call_operand.hbm [shape: f32[1,1], index: 6, kind: output, shape index: {1}]
  %7 = xla_tuple %s5, %s6
  %s8 = sld [smem:[#allocation0]]
  $region42: #{tpu_custom_call.1} parent=0
    _
  %s10 = ssub.s32 1, %s8
  %s11 = scalar_select 0, %s10, %s8
  %12 = sst [smem:[#allocation4]] %s0
  %13 = sst [smem:[#allocation5]] %s1
  $region1: #{tpu_custom_call.1} parent=0
    #allocation6 [shape = 'u8[4096]{0}', space=vmem, size = 0x1000, scoped, tag = 'input window, operand 2, single buffered']
    #allocation7 [shape = 's32[1]{0}', space=sflag, size = 0x4, scoped, tag = 'scoped memory for tpu_custom_call.1']
    #allocation8 [shape = 's32[1]{0}', space=sflag, size = 0x4, scoped, tag = 'scoped memory for tpu_custom_call.1']
    #allocation9 [shape = 'u8[512]{0}', space=smem, size = 0x200, scoped, tag = 'output window, operand 0, single buffered']
    #allocation10 [shape = 'u8[512]{0}', space=smem, size = 0x200, scoped, tag = 'output window, operand 1, single buffered']
    #allocation11 [shape = 's32[1]{0}', space=sflag, size = 0x4, scoped, tag = 'scoped memory for tpu_custom_call.1']
    %14 = vsyncpa [#allocation7], 0
    %15 = vsyncpa [#allocation8], 0
    %16 = vsyncpa [#allocation11], 0
    // Predicated region
    $region2: #{tpu_custom_call.1} parent=1 // pred_check
      _
    $region3: #{tpu_custom_call.1} parent=1 // pred_check_branch
      %18 = sbr.rel (0) target = $region5
    $region4: #{tpu_custom_call.1} parent=1 // pred_region
      %s19 = sld [smem:[#allocation4]]
      %s21 = ssub.s32 128, 128
      %22 = vsyncadd [#allocation7], %s21
      %s23 = smul.addr %s19, 128
      %s24 = scalar_lea.hbm %s2, %s23
      %s26 = sshll.u32 [#allocation6], 4
      %s27 = int_to_ptr.vmem [resolvable:$true] %s26
      %29 = dma.hbm_to_vmem [thread:$0]  %s24, 128, %s27, [#allocation7]
    $region5: #{tpu_custom_call.1} parent=1 // pred_fallthru
      _
    // Predicated region
    $region6: #{tpu_custom_call.1} parent=1 // pred_check
      _
    $region7: #{tpu_custom_call.1} parent=1 // pred_check_branch
      %31 = sbr.rel (0) target = $region9
    $region8: #{tpu_custom_call.1} parent=1 // pred_region
      %s32 = sld [smem:[#allocation5]]
      %p33 = scmp.lt.s32.totalorder %s32, 0
      %s34 = scalar_select %p33, %s32, 0
      %s35 = smul.addr %s34, 8
      %s36 = scalar_lea.vmem %s3, %s35
      %s37 = sld [smem:[#allocation5]]
    $region9: #{tpu_custom_call.1} parent=1 // pred_fallthru
      _
    // Predicated region
    $region10: #{tpu_custom_call.1} parent=1 // pred_check
      _
    $region11: #{tpu_custom_call.1} parent=1 // pred_check_branch
      %39 = sbr.rel (0) target = $region13
    $region12: #{tpu_custom_call.1} parent=1 // pred_region
      _
    $region13: #{tpu_custom_call.1} parent=1 // pred_fallthru
      _
    // Predicated region
    $region14: #{tpu_custom_call.1} parent=1 // pred_check
      _
    $region15: #{tpu_custom_call.1} parent=1 // pred_check_branch
      %41 = sbr.rel (0) target = $region17
    $region16: #{tpu_custom_call.1} parent=1 // pred_region
      %42 = dma.done [#allocation7], 128
    $region17: #{tpu_custom_call.1} parent=1 // pred_fallthru
      _
    %s43 = sld [smem:[#allocation5]]
    %p44 = scmp.lt.s32.totalorder %s43, 0
    %s45 = scalar_select %p44, %s43, 0
    %s46 = smul.addr %s45, 8
    %s47 = scalar_lea.vmem %s3, %s46
    %s48 = sld [smem:[#allocation4]]
    %s49 = sld [smem:[#allocation5]]
    %p50 = scmp.lt.s32.totalorder %s49, 0
    %s51 = scalar_select %p50, %s49, 0
    %s52 = smul.addr %s51, 8
    %s53 = scalar_lea.vmem %s3, %s52
    %s54 = sld [smem:[#allocation5]]
    %p55 = scmp.eq.s32.totalorder 0, 0
    // Predicated region
    $region18: #{tpu_custom_call.1} parent=1 // pred_check
      %p56 = pneg %p55
    $region19: #{tpu_custom_call.1} parent=1 // pred_check_branch
      %58 = sbr.rel (%p56) target = $region21
    $region20: #{tpu_custom_call.1} parent=1 // pred_region
      %s59 = scalar_lea.smem [#allocation2], 0
      %60 = sst [smem:[%s59]] 0.0
      %s61 = scalar_lea.smem [#allocation2], 1
      %62 = sst [smem:[%s61]] 0.0
      %s63 = scalar_lea.smem [#allocation2], 2
      %64 = sst [smem:[%s63]] -2.0
    $region21: #{tpu_custom_call.1} parent=1 // pred_fallthru
      _
    %s65 = sld [smem:[#allocation4]]
    %s66 = sld [smem:[#allocation5]]
    %v67 = vld [vmem:[%s4] sm:$0x1]
    %v68 = vld [vmem:[#allocation6] sm:$0xff]
    %v70 = vlaneseq
    %v71 = vshrl.u32 %v70, 7
    %v72 = vsub.s32 0, %v71
    %v73 = vrot.slane %v67, %v72
    %v75 = vsub.f32 %v68, %v73
    %v76 = vmul.f32 %v75, %v75
    %77 = vadd.xlane.f32.xlu0 %v76
    %v78 = vpop.xlane.xlu0 %77
    %v79 = vmax.f32 %v78, 1e-24
    %v80 = vrsqrt.pop %v79
    %v81 = vmul.f32 %v75, %v80
    %v82 = vld [vmem:[%s53] sm:$0xff]
    %v83 = vsub.f32 %v82, %v73
    %v84 = vmul.f32 %v83, %v83
    %85 = vadd.xlane.f32.xlu0 %v84
    %v86 = vpop.xlane.xlu0 %85
    %v87 = vmax.f32 %v86, 1e-24
    %v88 = vrsqrt.pop %v87
    %v89 = vmul.f32 %v83, %v88
    %v90 = vlaneseq
    %v91 = vshrl.u32 %v90, 7
    %v92 = vlaneseq
    %v93 = vand.u32 %v92, 127
    %s94 = smul.u32 %s65, 8
    %v95 = vstv %s94
    %v96 = vadd.s32 %v95, %v91
    %s97 = smul.u32 %s66, 8
    %v98 = vstv %s97
    %v99 = vadd.s32 %v98, %v93
    %vm100 = vcmp.eq.s32.totalorder %v96, %v99
    %101 = vmatprep.subr.mxu0 0.0
    %102 = vmatpush1.xpose.msra.mxu0 %v89
    %103 = vmatprep.subr.mxu0 0.0
    %104 = vmatpush1.xpose.msra.mxu0 0.0
    %105 = vmatprep.subr.mxu0 0.0
    %106 = vmatpush1.xpose.msra.mxu0 0.0
    %107 = vmatprep.subr.mxu0 0.0
    %108 = vmatpush1.xpose.msra.mxu0 0.0
    %109 = vmatprep.subr.mxu0 0.0
    %110 = vmatpush1.xpose.msra.mxu0 0.0
    %111 = vmatprep.subr.mxu0 0.0
    %112 = vmatpush1.xpose.msra.mxu0 0.0
    %113 = vmatprep.subr.mxu0 0.0
    %114 = vmatpush1.xpose.msra.mxu0 0.0
    %115 = vmatprep.subr.mxu0 0.0
    %116 = vmatpush1.xpose.msra.mxu0 0.0
    %117 = vmatprep.subr.mxu0 0.0
    %118 = vmatpush1.xpose.msra.mxu0 0.0
    %119 = vmatprep.subr.mxu0 0.0
    %120 = vmatpush1.xpose.msra.mxu0 0.0
    %121 = vmatprep.subr.mxu0 0.0
    %122 = vmatpush1.xpose.msra.mxu0 0.0
    %123 = vmatprep.subr.mxu0 0.0
    %124 = vmatpush1.xpose.msra.mxu0 0.0
    %125 = vmatprep.subr.mxu0 0.0
    %126 = vmatpush1.xpose.msra.mxu0 0.0
    %127 = vmatprep.subr.mxu0 0.0
    %128 = vmatpush1.xpose.msra.mxu0 0.0
    %129 = vmatprep.subr.mxu0 0.0
    %130 = vmatpush1.xpose.msra.mxu0 0.0
    %131 = vmatprep.subr.mxu0 0.0
    %132 = vmatpush1.xpose.msra.mxu0 0.0
    %133 = vmatprep.subr.mxu0 0.0
    %134 = vmatpush1.xpose.msra.mxu0 0.0
    %135 = vmatprep.subr.mxu0 0.0
    %136 = vmatpush1.xpose.msra.mxu0 0.0
    %137 = vmatprep.subr.mxu0 0.0
    %138 = vmatpush1.xpose.msra.mxu0 0.0
    %139 = vmatprep.subr.mxu0 0.0
    %140 = vmatpush1.xpose.msra.mxu0 0.0
    %141 = vmatprep.subr.mxu0 0.0
    %142 = vmatpush1.xpose.msra.mxu0 0.0
    %143 = vmatprep.subr.mxu0 0.0
    %144 = vmatpush1.xpose.msra.mxu0 0.0
    %145 = vmatprep.subr.mxu0 0.0
    %146 = vmatpush1.xpose.msra.mxu0 0.0
    %147 = vmatprep.subr.mxu0 0.0
    %148 = vmatpush1.xpose.msra.mxu0 0.0
    %149 = vmatprep.subr.mxu0 0.0
    %150 = vmatpush1.xpose.msra.mxu0 0.0
    %151 = vmatprep.subr.mxu0 0.0
    %152 = vmatpush1.xpose.msra.mxu0 0.0
    %153 = vmatprep.subr.mxu0 0.0
    %154 = vmatpush1.xpose.msra.mxu0 0.0
    %155 = vmatprep.subr.mxu0 0.0
    %156 = vmatpush1.xpose.msra.mxu0 0.0
    %157 = vmatprep.subr.mxu0 0.0
    %158 = vmatpush1.xpose.msra.mxu0 0.0
    %159 = vmatprep.subr.mxu0 0.0
    %160 = vmatpush1.xpose.msra.mxu0 0.0
    %161 = vmatprep.subr.mxu0 0.0
    %162 = vmatpush1.xpose.msra.mxu0 0.0
    %163 = vmatprep.subr.mxu0 0.0
    %164 = vmatpush1.xpose.msra.mxu0 0.0
    %165 = vmatprep.mubr.f32.mxu0 0.0
    %166 = vmatmul.mubr.f32.gmra.mrb[0].mxu0 %v81
    %v167 = vpop.f32.mrb[0].mxu0
    %v168 = vadd.f32 0.0, %v167
    %v169 = vpop.f32.mrb[0].mxu0
    %170 = vdwg.mxu0
    %v171 = vmul.f32 %v168, %v168
    %vm172 = vcmask 64512
    %v173 = vsel %vm172, %v171, 0.0
    %174 = vadd.xlane.f32.xlu0 %v173
    %v175 = vpop.xlane.xlu0 %174
    %v176 = vrot.slane %v175, 4
    %v177 = vadd.f32 %v175, %v176
    %v178 = vrot.slane %v177, 2
    %v179 = vadd.f32 %v177, %v178
    %v180 = vrot.slane %v179, 1
    %v181 = vadd.f32 %v179, %v180
    %s182 = vtos %v181
    %v183 = vsel %vm100, %v171, 0.0
    %v184 = vsel %vm172, %v183, 0.0
    %185 = vadd.xlane.f32.xlu0 %v184
    %v186 = vpop.xlane.xlu0 %185
    %v187 = vrot.slane %v186, 4
    %v188 = vadd.f32 %v186, %v187
    %v189 = vrot.slane %v188, 2
    %v190 = vadd.f32 %v188, %v189
    %v191 = vrot.slane %v190, 1
    %v192 = vadd.f32 %v190, %v191
    %s193 = vtos %v192
    %v194 = vsub.f32 0.0, %v168
    %v195 = vsel %vm100, %v194, %v168
    %v196 = vsel %vm172, %v195, -inf
    %197 = vmax.xlane.f32.xlu0 %v196
    %v198 = vpop.xlane.xlu0 %197
    %v199 = vrot.slane %v198, 4
    %v200 = vmax.f32 %v198, %v199
    %v201 = vrot.slane %v200, 2
    %v202 = vmax.f32 %v200, %v201
    %v203 = vrot.slane %v202, 1
    %v204 = vmax.f32 %v202, %v203
    %s205 = vtos %v204
    %p206 = scmp.eq.s32.totalorder %s65, %s66
    %s207 = scalar_select %p206, 1.0, 2.0
    %s208 = sld [smem:[#allocation2]]
    %s209 = smul.f32 %s207, %s182
    %s210 = sadd.f32 %s208, %s209
    %s211 = scalar_lea.smem [#allocation2], 0
    %212 = sst [smem:[%s211]] %s210
    %s213 = sld [smem:[#allocation2 + $0x1]]
    %s214 = sadd.f32 %s213, %s193
    %s215 = scalar_lea.smem [#allocation2], 1
    %216 = sst [smem:[%s215]] %s214
    %s217 = sld [smem:[#allocation2 + $0x2]]
    %s218 = smax.f32 %s217, %s205
    %s219 = scalar_lea.smem [#allocation2], 2
    %220 = sst [smem:[%s219]] %s218
    // Predicated region
    $region22: #{tpu_custom_call.1} parent=1 // pred_check
      %p221 = pneg %p55
    $region23: #{tpu_custom_call.1} parent=1 // pred_check_branch
      %223 = sbr.rel (%p221) target = $region25
    $region24: #{tpu_custom_call.1} parent=1 // pred_region
      %s224 = sld [smem:[#allocation2]]
      %s225 = sld [smem:[#allocation2 + $0x1]]
      %s226 = smul.f32 %s225, 0.97959185
      %s227 = ssub.f32 %s224, %s226
      %s228 = smax.f32 %s227, 0.0
      %v229 = vstv %s228
      %v230 = vrsqrt.pop %v229
      %v231 = vmul.f32 %v229, %v230
      %vm232 = vcmp.eq.f32.partialorder %v229, inf
      %v233 = vsel %vm232, %v229, %v231
      %vm234 = vcmp.eq.f32.partialorder %v229, 0.0
      %v235 = vand.u32 %v229, 2147483648
      %v236 = vsel %vm234, %v235, %v233
      %s237 = vtos %v236
      %s238 = scalar_lea.smem [#allocation9], 0
      %239 = sst [smem:[%s238]] %s237
      %s240 = sld [smem:[#allocation2 + $0x2]]
      %s241 = smax.f32 %s240, -0.99999
      %s242 = smin.f32 %s241, 0.99999
      %s243 = scalar_lea.smem [#allocation10], 0
      %244 = sst [smem:[%s243]] %s242
    $region25: #{tpu_custom_call.1} parent=1 // pred_fallthru
      _
    // Predicated region
    $region26: #{tpu_custom_call.1} parent=1 // pred_check
      _
    $region27: #{tpu_custom_call.1} parent=1 // pred_check_branch
      %246 = sbr.rel (0) target = $region29
    $region28: #{tpu_custom_call.1} parent=1 // pred_region
      %s248 = ssub.s32 16, 16
      %249 = vsyncadd [#allocation8], %s248
      %252 = dma.smem_to_hbm [#allocation9], 16, %s5, [#allocation8]
    $region29: #{tpu_custom_call.1} parent=1 // pred_fallthru
      _
    // Predicated region
    $region30: #{tpu_custom_call.1} parent=1 // pred_check
      _
    $region31: #{tpu_custom_call.1} parent=1 // pred_check_branch
      %254 = sbr.rel (0) target = $region33
    $region32: #{tpu_custom_call.1} parent=1 // pred_region
      %s256 = ssub.s32 16, 16
      %257 = vsyncadd [#allocation11], %s256
      %260 = dma.smem_to_hbm [#allocation10], 16, %s6, [#allocation11]
    $region33: #{tpu_custom_call.1} parent=1 // pred_fallthru
      _
    // Predicated region
    $region34: #{tpu_custom_call.1} parent=1 // pred_check
      _
    $region35: #{tpu_custom_call.1} parent=1 // pred_check_branch
      %262 = sbr.rel (0) target = $region37
    $region36: #{tpu_custom_call.1} parent=1 // pred_region
      %263 = dma.done [#allocation8], 16
    $region37: #{tpu_custom_call.1} parent=1 // pred_fallthru
      _
    // Predicated region
    $region38: #{tpu_custom_call.1} parent=1 // pred_check
      _
    $region39: #{tpu_custom_call.1} parent=1 // pred_check_branch
      %265 = sbr.rel (0) target = $region41
    $region40: #{tpu_custom_call.1} parent=1 // pred_region
      %266 = dma.done [#allocation11], 16
    $region41: #{tpu_custom_call.1} parent=1 // pred_fallthru
      _
    %267 = sfence
    %268 = vsyncpa [#allocation7], 1
    %269 = vsyncpa [#allocation8], 1
    %270 = vsyncpa [#allocation11], 1

</llo_original>
